<compile_context>
chip_gen: v5e
topology: v5e:2x2
jax: 0.10.0
libtpu: 0.0.40
codegen_flags: <defaults>
</compile_context>

<pallas_src>
import functools

import jax
import jax.numpy as jnp
from jax.experimental import pallas as pl
from jax.experimental.pallas import tpu as pltpu


# ---------------------------------------------------------------------------
# In-kernel math helpers (pure jnp / lax; traced inside the kernel body)
# ---------------------------------------------------------------------------
def _gelu_exact(x):
    # PyTorch nn.GELU() default = exact erf-based GELU.
    return 0.5 * x * (1.0 + jax.lax.erf(x * (1.0 / jnp.sqrt(2.0).astype(x.dtype))))


def _layernorm(x, gamma, beta, eps=1e-5):
    # PyTorch nn.LayerNorm over the last dim, eps=1e-5 (biased variance).
    mean = jnp.mean(x, axis=-1, keepdims=True)
    cent = x - mean
    var = jnp.mean(cent * cent, axis=-1, keepdims=True)
    return cent * jax.lax.rsqrt(var + eps) * gamma + beta


def _softplus(x):
    # Numerically stable softplus == torch.nn.Softplus (beta=1).
    return jnp.maximum(x, 0.0) + jnp.log(1.0 + jnp.exp(-jnp.abs(x)))


# ---------------------------------------------------------------------------
# Fused actor kernel: one batch tile per grid step.
# Heads are fused: wh = [w_mu | w_ls]  ->  out = [tanh(.) | softplus(.)].
# ---------------------------------------------------------------------------
def actor_kernel(x_ref,
                 w1_ref, b1_ref, g1_ref, be1_ref,
                 w2_ref, b2_ref, g2_ref, be2_ref,
                 w3_ref, b3_ref, g3_ref, be3_ref,
                 wh_ref, bh_ref,
                 out_ref, *, num_outputs):
    # Hoist all parameter reads to the top of the body (cheap insurance: JAX
    # does not CSE broadcast_in_dim if this body ever gains an inner loop).
    w1, b1, g1, be1 = w1_ref[...], b1_ref[...], g1_ref[...], be1_ref[...]
    w2, b2, g2, be2 = w2_ref[...], b2_ref[...], g2_ref[...], be2_ref[...]
    w3, b3, g3, be3 = w3_ref[...], b3_ref[...], g3_ref[...], be3_ref[...]
    wh, bh = wh_ref[...], bh_ref[...]

    x = x_ref[...].astype(jnp.float32)

    # common: Linear -> LayerNorm -> GELU  (x3)
    h = jnp.dot(x, w1, preferred_element_type=jnp.float32) + b1
    h = _gelu_exact(_layernorm(h, g1, be1))

    h = jnp.dot(h, w2, preferred_element_type=jnp.float32) + b2
    h = _gelu_exact(_layernorm(h, g2, be2))

    h = jnp.dot(h, w3, preferred_element_type=jnp.float32) + b3
    h = _gelu_exact(_layernorm(h, g3, be3))

    # Fused heads: one matmul over [H3, 2*out]; first half -> tanh (mu),
    # second half -> softplus (logstd).  Column mask avoids slice/concat
    # materialization inside the kernel.
    head = jnp.dot(h, wh, preferred_element_type=jnp.float32) + bh
    col = jax.lax.broadcasted_iota(jnp.int32, head.shape, 1)
    out = jnp.where(col < num_outputs, jnp.tanh(head), _softplus(head))

    out_ref[...] = out.astype(out_ref.dtype)

    # TODO(synk): the torch.isnan(mu_v) -> slack.send_message / exit(-1) branch
    # is host-side error reporting with no Pallas equivalent; omitted.


# ---------------------------------------------------------------------------
# Wrapper: tile-size selection, padding, BlockSpecs / grid, pallas_call
# ---------------------------------------------------------------------------
def _choose_batch_tile(B, max_tile=512):
    # Multiple of 8 (sublane), capped so per-step VMEM stays tiny, and sized so
    # the grid has >= 2 steps when possible (v7x: 2 TensorCores share the grid).
    if B <= 8:
        return 8
    half = pl.cdiv(B, 2)
    tile = pl.cdiv(half, 8) * 8
    return min(tile, max_tile)


def gaussian_actor_forward(x, params, *, batch_tile=None):
    B, num_inputs = x.shape
    num_outputs = params["w_mu"].shape[1]
    head_dim = 2 * num_outputs

    if batch_tile is None:
        batch_tile = _choose_batch_tile(B)

    # Pad the batch so the performance-optimal tile is usable for any B.
    grid_len = pl.cdiv(B, batch_tile)
    padded_B = grid_len * batch_tile
    x_p = x if padded_B == B else jnp.pad(x, ((0, padded_B - B), (0, 0)))

    # Fuse the two head projections into a single weight / bias.
    w_head = jnp.concatenate([params["w_mu"], params["w_ls"]], axis=1)
    b_head = jnp.concatenate([params["b_mu"], params["b_ls"]], axis=1)

    ordered = [
        params["w1"], params["b1"], params["g1"], params["be1"],
        params["w2"], params["b2"], params["g2"], params["be2"],
        params["w3"], params["b3"], params["g3"], params["be3"],
        w_head, b_head,
    ]

    def full2d(arr):
        # Grid-invariant parameters: constant index_map -> no re-fetch DMAs.
        return pl.BlockSpec(arr.shape, lambda i: (0, 0))

    x_spec = pl.BlockSpec((batch_tile, num_inputs), lambda i: (i, 0))
    out_spec = pl.BlockSpec((batch_tile, head_dim), lambda i: (i, 0))
    in_specs = [x_spec] + [full2d(a) for a in ordered]

    out = pl.pallas_call(
        functools.partial(actor_kernel, num_outputs=num_outputs),
        out_shape=jax.ShapeDtypeStruct((padded_B, head_dim), x.dtype),
        grid_spec=pltpu.PrefetchScalarGridSpec(
            num_scalar_prefetch=0,
            grid=(grid_len,),
            in_specs=in_specs,
            out_specs=out_spec,
        ),
        compiler_params=pltpu.CompilerParams(
            dimension_semantics=("parallel",)),
    )(x_p, *ordered)

    mu = out[:B, :num_outputs]
    logstd = out[:B, num_outputs:]
    return mu, logstd


# ---------------------------------------------------------------------------
# Pure-JAX reference (for correctness validation of the fused kernel)
# ---------------------------------------------------------------------------
def reference_forward(x, params):
    def block(h, w, b, g, be):
        h = h @ w + b
        return _gelu_exact(_layernorm(h, g, be))

    h = block(x, params["w1"], params["b1"], params["g1"], params["be1"])
    h = block(h, params["w2"], params["b2"], params["g2"], params["be2"])
    h = block(h, params["w3"], params["b3"], params["g3"], params["be3"])
    mu = jnp.tanh(h @ params["w_mu"] + params["b_mu"])
    logstd = _softplus(h @ params["w_ls"] + params["b_ls"])
    return mu, logstd


# ---------------------------------------------------------------------------
# Deterministic parameter construction (PyTorch-like uniform fan-in init)
# ---------------------------------------------------------------------------
def make_params(key, num_inputs, h1, h2, h3, num_outputs):
    def linear(k, fan_in, fan_out):
        kw, kb = jax.random.split(k)
        bound = 1.0 / jnp.sqrt(fan_in)
        w = jax.random.uniform(kw, (fan_in, fan_out), jnp.float32, -bound, bound)
        b = jax.random.uniform(kb, (1, fan_out), jnp.float32, -bound, bound)
        return w, b

    ks = jax.random.split(key, 5)
    w1, b1 = linear(ks[0], num_inputs, h1)
    w2, b2 = linear(ks[1], h1, h2)
    w3, b3 = linear(ks[2], h2, h3)
    w_mu, b_mu = linear(ks[3], h3, num_outputs)
    w_ls, b_ls = linear(ks[4], h3, num_outputs)

    # LayerNorm affine params (PyTorch default init: gamma=1, beta=0),
    # kept as explicit (1, H) arrays for 2D-friendly VMEM layout.
    return dict(
        w1=w1, b1=b1, g1=jnp.ones((1, h1), jnp.float32), be1=jnp.zeros((1, h1), jnp.float32),
        w2=w2, b2=b2, g2=jnp.ones((1, h2), jnp.float32), be2=jnp.zeros((1, h2), jnp.float32),
        w3=w3, b3=b3, g3=jnp.ones((1, h3), jnp.float32), be3=jnp.zeros((1, h3), jnp.float32),
        w_mu=w_mu, b_mu=b_mu, w_ls=w_ls, b_ls=b_ls,
    )


if __name__ == "__main__":
    # Small shapes consistent with the MLP module.
    B, NUM_INPUTS, H1, H2, H3, NUM_OUTPUTS = 16, 16, 32, 32, 32, 8

    key = jax.random.PRNGKey(0)
    k_x, k_p = jax.random.split(key)
    x = jax.random.normal(k_x, (B, NUM_INPUTS), jnp.float32)
    params = make_params(k_p, NUM_INPUTS, H1, H2, H3, NUM_OUTPUTS)

    mu_v, logstd_v = gaussian_actor_forward(x, params)   # B=16 -> tile=8, grid=(2,)
    jax.block_until_ready((mu_v, logstd_v))

    assert mu_v.shape == (B, NUM_OUTPUTS) and logstd_v.shape == (B, NUM_OUTPUTS)
    assert not bool(jnp.any(jnp.isnan(mu_v))) and not bool(jnp.any(jnp.isnan(logstd_v)))
    # Tanh output bounded, Softplus output non-negative.
    assert bool(jnp.all(jnp.abs(mu_v) <= 1.0)) and bool(jnp.all(logstd_v >= 0.0))

    # Validate against the pure-JAX reference.
    mu_r, logstd_r = reference_forward(x, params)
    assert bool(jnp.allclose(mu_v, mu_r, atol=1e-5, rtol=1e-5))
    assert bool(jnp.allclose(logstd_v, logstd_r, atol=1e-5, rtol=1e-5))

    print("KERNEL_OK")
</pallas_src>

<mosaic_0001>
module attributes {stable_mosaic.version = 11 : i64} {
  func.func @actor_kernel(%arg0: i32, %arg1: memref<8x16xf32, #tpu.memory_space<vmem>>, %arg2: memref<16x32xf32, #tpu.memory_space<vmem>>, %arg3: memref<1x32xf32, #tpu.memory_space<vmem>>, %arg4: memref<1x32xf32, #tpu.memory_space<vmem>>, %arg5: memref<1x32xf32, #tpu.memory_space<vmem>>, %arg6: memref<32x32xf32, #tpu.memory_space<vmem>>, %arg7: memref<1x32xf32, #tpu.memory_space<vmem>>, %arg8: memref<1x32xf32, #tpu.memory_space<vmem>>, %arg9: memref<1x32xf32, #tpu.memory_space<vmem>>, %arg10: memref<32x32xf32, #tpu.memory_space<vmem>>, %arg11: memref<1x32xf32, #tpu.memory_space<vmem>>, %arg12: memref<1x32xf32, #tpu.memory_space<vmem>>, %arg13: memref<1x32xf32, #tpu.memory_space<vmem>>, %arg14: memref<32x16xf32, #tpu.memory_space<vmem>>, %arg15: memref<1x16xf32, #tpu.memory_space<vmem>>, %arg16: memref<8x16xf32, #tpu.memory_space<vmem>>) attributes {dimension_semantics = [#tpu.dimension_semantics<parallel>], iteration_bounds = array<i64: 2>, scalar_prefetch = 0 : i64, scratch_operands = 0 : i64, tpu.core_type = #tpu.core_type<tc>, window_params = [{transform_indices = @transform_0, window_bounds = array<i64: 8, 16>}, {pipeline_mode = #tpu.pipeline_mode<synchronous>, transform_indices = @transform_1, window_bounds = array<i64: 16, 32>}, {pipeline_mode = #tpu.pipeline_mode<synchronous>, transform_indices = @transform_2, window_bounds = array<i64: 1, 32>}, {pipeline_mode = #tpu.pipeline_mode<synchronous>, transform_indices = @transform_3, window_bounds = array<i64: 1, 32>}, {pipeline_mode = #tpu.pipeline_mode<synchronous>, transform_indices = @transform_4, window_bounds = array<i64: 1, 32>}, {pipeline_mode = #tpu.pipeline_mode<synchronous>, transform_indices = @transform_5, window_bounds = array<i64: 32, 32>}, {pipeline_mode = #tpu.pipeline_mode<synchronous>, transform_indices = @transform_6, window_bounds = array<i64: 1, 32>}, {pipeline_mode = #tpu.pipeline_mode<synchronous>, transform_indices = @transform_7, window_bounds = array<i64: 1, 32>}, {pipeline_mode = #tpu.pipeline_mode<synchronous>, transform_indices = @transform_8, window_bounds = array<i64: 1, 32>}, {pipeline_mode = #tpu.pipeline_mode<synchronous>, transform_indices = @transform_9, window_bounds = array<i64: 32, 32>}, {pipeline_mode = #tpu.pipeline_mode<synchronous>, transform_indices = @transform_10, window_bounds = array<i64: 1, 32>}, {pipeline_mode = #tpu.pipeline_mode<synchronous>, transform_indices = @transform_11, window_bounds = array<i64: 1, 32>}, {pipeline_mode = #tpu.pipeline_mode<synchronous>, transform_indices = @transform_12, window_bounds = array<i64: 1, 32>}, {pipeline_mode = #tpu.pipeline_mode<synchronous>, transform_indices = @transform_13, window_bounds = array<i64: 32, 16>}, {pipeline_mode = #tpu.pipeline_mode<synchronous>, transform_indices = @transform_14, window_bounds = array<i64: 1, 16>}, {transform_indices = @transform_15, window_bounds = array<i64: 8, 16>}]} {
    %c0 = arith.constant 0 : index
    %c0_0 = arith.constant 0 : index
    %0 = vector.load %arg2[%c0, %c0_0] : memref<16x32xf32, #tpu.memory_space<vmem>>, vector<16x32xf32>
    %c0_1 = arith.constant 0 : index
    %c0_2 = arith.constant 0 : index
    %1 = vector.load %arg3[%c0_1, %c0_2] : memref<1x32xf32, #tpu.memory_space<vmem>>, vector<1x32xf32>
    %c0_3 = arith.constant 0 : index
    %c0_4 = arith.constant 0 : index
    %2 = vector.load %arg4[%c0_3, %c0_4] : memref<1x32xf32, #tpu.memory_space<vmem>>, vector<1x32xf32>
    %c0_5 = arith.constant 0 : index
    %c0_6 = arith.constant 0 : index
    %3 = vector.load %arg5[%c0_5, %c0_6] : memref<1x32xf32, #tpu.memory_space<vmem>>, vector<1x32xf32>
    %c0_7 = arith.constant 0 : index
    %c0_8 = arith.constant 0 : index
    %4 = vector.load %arg6[%c0_7, %c0_8] : memref<32x32xf32, #tpu.memory_space<vmem>>, vector<32x32xf32>
    %c0_9 = arith.constant 0 : index
    %c0_10 = arith.constant 0 : index
    %5 = vector.load %arg7[%c0_9, %c0_10] : memref<1x32xf32, #tpu.memory_space<vmem>>, vector<1x32xf32>
    %c0_11 = arith.constant 0 : index
    %c0_12 = arith.constant 0 : index
    %6 = vector.load %arg8[%c0_11, %c0_12] : memref<1x32xf32, #tpu.memory_space<vmem>>, vector<1x32xf32>
    %c0_13 = arith.constant 0 : index
    %c0_14 = arith.constant 0 : index
    %7 = vector.load %arg9[%c0_13, %c0_14] : memref<1x32xf32, #tpu.memory_space<vmem>>, vector<1x32xf32>
    %c0_15 = arith.constant 0 : index
    %c0_16 = arith.constant 0 : index
    %8 = vector.load %arg10[%c0_15, %c0_16] : memref<32x32xf32, #tpu.memory_space<vmem>>, vector<32x32xf32>
    %c0_17 = arith.constant 0 : index
    %c0_18 = arith.constant 0 : index
    %9 = vector.load %arg11[%c0_17, %c0_18] : memref<1x32xf32, #tpu.memory_space<vmem>>, vector<1x32xf32>
    %c0_19 = arith.constant 0 : index
    %c0_20 = arith.constant 0 : index
    %10 = vector.load %arg12[%c0_19, %c0_20] : memref<1x32xf32, #tpu.memory_space<vmem>>, vector<1x32xf32>
    %c0_21 = arith.constant 0 : index
    %c0_22 = arith.constant 0 : index
    %11 = vector.load %arg13[%c0_21, %c0_22] : memref<1x32xf32, #tpu.memory_space<vmem>>, vector<1x32xf32>
    %c0_23 = arith.constant 0 : index
    %c0_24 = arith.constant 0 : index
    %12 = vector.load %arg14[%c0_23, %c0_24] : memref<32x16xf32, #tpu.memory_space<vmem>>, vector<32x16xf32>
    %c0_25 = arith.constant 0 : index
    %c0_26 = arith.constant 0 : index
    %13 = vector.load %arg15[%c0_25, %c0_26] : memref<1x16xf32, #tpu.memory_space<vmem>>, vector<1x16xf32>
    %c0_27 = arith.constant 0 : index
    %c0_28 = arith.constant 0 : index
    %14 = vector.load %arg1[%c0_27, %c0_28] : memref<8x16xf32, #tpu.memory_space<vmem>>, vector<8x16xf32>
    %cst = arith.constant dense<0.000000e+00> : vector<8x32xf32>
    %15 = tpu.matmul %14, %0, %cst {dimension_numbers = #tpu.dot_dimension_numbers<[1], [0], [0], [1], [0, 0, 1, 1], [], []>} : vector<8x16xf32>, vector<16x32xf32>, vector<8x32xf32> -> vector<8x32xf32>
    %16 = vector.broadcast %1 : vector<1x32xf32> to vector<8x32xf32>
    %17 = arith.addf %15, %16 : vector<8x32xf32>
    %cst_29 = arith.constant dense<0.000000e+00> : vector<8xf32>
    %18 = vector.multi_reduction <add>, %17, %cst_29 [1] : vector<8x32xf32> to vector<8xf32>
    %19 = vector.shape_cast %18 : vector<8xf32> to vector<8x1xf32>
    %cst_30 = arith.constant 3.200000e+01 : f32
    %20 = vector.broadcast %cst_30 : f32 to vector<8x1xf32>
    %21 = arith.divf %19, %20 : vector<8x1xf32>
    %22 = vector.broadcast %21 : vector<8x1xf32> to vector<8x32xf32>
    %23 = arith.subf %17, %22 : vector<8x32xf32>
    %24 = arith.mulf %23, %23 : vector<8x32xf32>
    %cst_31 = arith.constant dense<0.000000e+00> : vector<8xf32>
    %25 = vector.multi_reduction <add>, %24, %cst_31 [1] : vector<8x32xf32> to vector<8xf32>
    %26 = vector.shape_cast %25 : vector<8xf32> to vector<8x1xf32>
    %cst_32 = arith.constant 3.200000e+01 : f32
    %27 = vector.broadcast %cst_32 : f32 to vector<8x1xf32>
    %28 = arith.divf %26, %27 : vector<8x1xf32>
    %cst_33 = arith.constant 9.99999974E-6 : f32
    %29 = vector.broadcast %cst_33 : f32 to vector<8x1xf32>
    %30 = arith.addf %28, %29 : vector<8x1xf32>
    %31 = math.rsqrt %30 : vector<8x1xf32>
    %32 = vector.broadcast %31 : vector<8x1xf32> to vector<8x32xf32>
    %33 = arith.mulf %23, %32 : vector<8x32xf32>
    %34 = vector.broadcast %2 : vector<1x32xf32> to vector<8x32xf32>
    %35 = arith.mulf %33, %34 : vector<8x32xf32>
    %36 = vector.broadcast %3 : vector<1x32xf32> to vector<8x32xf32>
    %37 = arith.addf %35, %36 : vector<8x32xf32>
    %cst_34 = arith.constant 5.000000e-01 : f32
    %38 = vector.broadcast %cst_34 : f32 to vector<8x32xf32>
    %39 = arith.mulf %38, %37 : vector<8x32xf32>
    %cst_35 = arith.constant 2.000000e+00 : f32
    %40 = math.sqrt %cst_35 : f32
    %cst_36 = arith.constant 1.000000e+00 : f32
    %41 = arith.divf %cst_36, %40 : f32
    %42 = vector.broadcast %41 : f32 to vector<8x32xf32>
    %43 = arith.mulf %37, %42 : vector<8x32xf32>
    %44 = math.erf %43 : vector<8x32xf32>
    %cst_37 = arith.constant 1.000000e+00 : f32
    %45 = vector.broadcast %cst_37 : f32 to vector<8x32xf32>
    %46 = arith.addf %45, %44 : vector<8x32xf32>
    %47 = arith.mulf %39, %46 : vector<8x32xf32>
    %cst_38 = arith.constant dense<0.000000e+00> : vector<8x32xf32>
    %48 = tpu.matmul %47, %4, %cst_38 {dimension_numbers = #tpu.dot_dimension_numbers<[1], [0], [0], [1], [0, 0, 1, 1], [], []>} : vector<8x32xf32>, vector<32x32xf32>, vector<8x32xf32> -> vector<8x32xf32>
    %49 = vector.broadcast %5 : vector<1x32xf32> to vector<8x32xf32>
    %50 = arith.addf %48, %49 : vector<8x32xf32>
    %cst_39 = arith.constant dense<0.000000e+00> : vector<8xf32>
    %51 = vector.multi_reduction <add>, %50, %cst_39 [1] : vector<8x32xf32> to vector<8xf32>
    %52 = vector.shape_cast %51 : vector<8xf32> to vector<8x1xf32>
    %cst_40 = arith.constant 3.200000e+01 : f32
    %53 = vector.broadcast %cst_40 : f32 to vector<8x1xf32>
    %54 = arith.divf %52, %53 : vector<8x1xf32>
    %55 = vector.broadcast %54 : vector<8x1xf32> to vector<8x32xf32>
    %56 = arith.subf %50, %55 : vector<8x32xf32>
    %57 = arith.mulf %56, %56 : vector<8x32xf32>
    %cst_41 = arith.constant dense<0.000000e+00> : vector<8xf32>
    %58 = vector.multi_reduction <add>, %57, %cst_41 [1] : vector<8x32xf32> to vector<8xf32>
    %59 = vector.shape_cast %58 : vector<8xf32> to vector<8x1xf32>
    %cst_42 = arith.constant 3.200000e+01 : f32
    %60 = vector.broadcast %cst_42 : f32 to vector<8x1xf32>
    %61 = arith.divf %59, %60 : vector<8x1xf32>
    %cst_43 = arith.constant 9.99999974E-6 : f32
    %62 = vector.broadcast %cst_43 : f32 to vector<8x1xf32>
    %63 = arith.addf %61, %62 : vector<8x1xf32>
    %64 = math.rsqrt %63 : vector<8x1xf32>
    %65 = vector.broadcast %64 : vector<8x1xf32> to vector<8x32xf32>
    %66 = arith.mulf %56, %65 : vector<8x32xf32>
    %67 = vector.broadcast %6 : vector<1x32xf32> to vector<8x32xf32>
    %68 = arith.mulf %66, %67 : vector<8x32xf32>
    %69 = vector.broadcast %7 : vector<1x32xf32> to vector<8x32xf32>
    %70 = arith.addf %68, %69 : vector<8x32xf32>
    %cst_44 = arith.constant 5.000000e-01 : f32
    %71 = vector.broadcast %cst_44 : f32 to vector<8x32xf32>
    %72 = arith.mulf %71, %70 : vector<8x32xf32>
    %cst_45 = arith.constant 2.000000e+00 : f32
    %73 = math.sqrt %cst_45 : f32
    %cst_46 = arith.constant 1.000000e+00 : f32
    %74 = arith.divf %cst_46, %73 : f32
    %75 = vector.broadcast %74 : f32 to vector<8x32xf32>
    %76 = arith.mulf %70, %75 : vector<8x32xf32>
    %77 = math.erf %76 : vector<8x32xf32>
    %cst_47 = arith.constant 1.000000e+00 : f32
    %78 = vector.broadcast %cst_47 : f32 to vector<8x32xf32>
    %79 = arith.addf %78, %77 : vector<8x32xf32>
    %80 = arith.mulf %72, %79 : vector<8x32xf32>
    %cst_48 = arith.constant dense<0.000000e+00> : vector<8x32xf32>
    %81 = tpu.matmul %80, %8, %cst_48 {dimension_numbers = #tpu.dot_dimension_numbers<[1], [0], [0], [1], [0, 0, 1, 1], [], []>} : vector<8x32xf32>, vector<32x32xf32>, vector<8x32xf32> -> vector<8x32xf32>
    %82 = vector.broadcast %9 : vector<1x32xf32> to vector<8x32xf32>
    %83 = arith.addf %81, %82 : vector<8x32xf32>
    %cst_49 = arith.constant dense<0.000000e+00> : vector<8xf32>
    %84 = vector.multi_reduction <add>, %83, %cst_49 [1] : vector<8x32xf32> to vector<8xf32>
    %85 = vector.shape_cast %84 : vector<8xf32> to vector<8x1xf32>
    %cst_50 = arith.constant 3.200000e+01 : f32
    %86 = vector.broadcast %cst_50 : f32 to vector<8x1xf32>
    %87 = arith.divf %85, %86 : vector<8x1xf32>
    %88 = vector.broadcast %87 : vector<8x1xf32> to vector<8x32xf32>
    %89 = arith.subf %83, %88 : vector<8x32xf32>
    %90 = arith.mulf %89, %89 : vector<8x32xf32>
    %cst_51 = arith.constant dense<0.000000e+00> : vector<8xf32>
    %91 = vector.multi_reduction <add>, %90, %cst_51 [1] : vector<8x32xf32> to vector<8xf32>
    %92 = vector.shape_cast %91 : vector<8xf32> to vector<8x1xf32>
    %cst_52 = arith.constant 3.200000e+01 : f32
    %93 = vector.broadcast %cst_52 : f32 to vector<8x1xf32>
    %94 = arith.divf %92, %93 : vector<8x1xf32>
    %cst_53 = arith.constant 9.99999974E-6 : f32
    %95 = vector.broadcast %cst_53 : f32 to vector<8x1xf32>
    %96 = arith.addf %94, %95 : vector<8x1xf32>
    %97 = math.rsqrt %96 : vector<8x1xf32>
    %98 = vector.broadcast %97 : vector<8x1xf32> to vector<8x32xf32>
    %99 = arith.mulf %89, %98 : vector<8x32xf32>
    %100 = vector.broadcast %10 : vector<1x32xf32> to vector<8x32xf32>
    %101 = arith.mulf %99, %100 : vector<8x32xf32>
    %102 = vector.broadcast %11 : vector<1x32xf32> to vector<8x32xf32>
    %103 = arith.addf %101, %102 : vector<8x32xf32>
    %cst_54 = arith.constant 5.000000e-01 : f32
    %104 = vector.broadcast %cst_54 : f32 to vector<8x32xf32>
    %105 = arith.mulf %104, %103 : vector<8x32xf32>
    %cst_55 = arith.constant 2.000000e+00 : f32
    %106 = math.sqrt %cst_55 : f32
    %cst_56 = arith.constant 1.000000e+00 : f32
    %107 = arith.divf %cst_56, %106 : f32
    %108 = vector.broadcast %107 : f32 to vector<8x32xf32>
    %109 = arith.mulf %103, %108 : vector<8x32xf32>
    %110 = math.erf %109 : vector<8x32xf32>
    %cst_57 = arith.constant 1.000000e+00 : f32
    %111 = vector.broadcast %cst_57 : f32 to vector<8x32xf32>
    %112 = arith.addf %111, %110 : vector<8x32xf32>
    %113 = arith.mulf %105, %112 : vector<8x32xf32>
    %cst_58 = arith.constant dense<0.000000e+00> : vector<8x16xf32>
    %114 = tpu.matmul %113, %12, %cst_58 {dimension_numbers = #tpu.dot_dimension_numbers<[1], [0], [0], [1], [0, 0, 1, 1], [], []>} : vector<8x32xf32>, vector<32x16xf32>, vector<8x16xf32> -> vector<8x16xf32>
    %115 = vector.broadcast %13 : vector<1x16xf32> to vector<8x16xf32>
    %116 = arith.addf %114, %115 : vector<8x16xf32>
    %117 = tpu.iota {dimensions = array<i32: 1>} : vector<8x16xi32>
    %c8_i32 = arith.constant 8 : i32
    %118 = vector.broadcast %c8_i32 : i32 to vector<8x16xi32>
    %119 = arith.cmpi slt, %117, %118 : vector<8x16xi32>
    %120 = math.tanh %116 : vector<8x16xf32>
    %cst_59 = arith.constant 0.000000e+00 : f32
    %121 = vector.broadcast %cst_59 : f32 to vector<8x16xf32>
    %122 = arith.maximumf %116, %121 : vector<8x16xf32>
    %123 = math.absf %116 : vector<8x16xf32>
    %cst_60 = arith.constant 0.000000e+00 : f32
    %124 = vector.broadcast %cst_60 : f32 to vector<8x16xf32>
    %125 = arith.subf %124, %123 : vector<8x16xf32>
    %126 = math.exp %125 : vector<8x16xf32>
    %cst_61 = arith.constant 1.000000e+00 : f32
    %127 = vector.broadcast %cst_61 : f32 to vector<8x16xf32>
    %128 = arith.addf %127, %126 : vector<8x16xf32>
    %129 = math.log %128 : vector<8x16xf32>
    %130 = arith.addf %122, %129 : vector<8x16xf32>
    %131 = arith.select %119, %120, %130 : vector<8x16xi1>, vector<8x16xf32>
    %c0_62 = arith.constant 0 : index
    %c0_63 = arith.constant 0 : index
    %132 = vector.load %arg16[%c0_62, %c0_63] : memref<8x16xf32, #tpu.memory_space<vmem>>, vector<8x16xf32>
    tpu.vector_store %arg16[%c0_62, %c0_63], %131 {strides = array<i32>} : memref<8x16xf32, #tpu.memory_space<vmem>>, vector<8x16xf32>,
    return
  }
  func.func @transform_0(%arg0: i32) -> (i32, i32) {
    %c0_i32 = arith.constant 0 : i32
    %c0_i32_0 = arith.constant 0 : i32
    return %arg0, %c0_i32 : i32, i32
  }
  func.func @transform_1(%arg0: i32) -> (i32, i32) {
    %c0_i32 = arith.constant 0 : i32
    %c0_i32_0 = arith.constant 0 : i32
    %c0_i32_1 = arith.constant 0 : i32
    return %c0_i32, %c0_i32_0 : i32, i32
  }
  func.func @transform_2(%arg0: i32) -> (i32, i32) {
    %c0_i32 = arith.constant 0 : i32
    %c0_i32_0 = arith.constant 0 : i32
    %c0_i32_1 = arith.constant 0 : i32
    return %c0_i32, %c0_i32_0 : i32, i32
  }
  func.func @transform_3(%arg0: i32) -> (i32, i32) {
    %c0_i32 = arith.constant 0 : i32
    %c0_i32_0 = arith.constant 0 : i32
    %c0_i32_1 = arith.constant 0 : i32
    return %c0_i32, %c0_i32_0 : i32, i32
  }
  func.func @transform_4(%arg0: i32) -> (i32, i32) {
    %c0_i32 = arith.constant 0 : i32
    %c0_i32_0 = arith.constant 0 : i32
    %c0_i32_1 = arith.constant 0 : i32
    return %c0_i32, %c0_i32_0 : i32, i32
  }
  func.func @transform_5(%arg0: i32) -> (i32, i32) {
    %c0_i32 = arith.constant 0 : i32
    %c0_i32_0 = arith.constant 0 : i32
    %c0_i32_1 = arith.constant 0 : i32
    return %c0_i32, %c0_i32_0 : i32, i32
  }
  func.func @transform_6(%arg0: i32) -> (i32, i32) {
    %c0_i32 = arith.constant 0 : i32
    %c0_i32_0 = arith.constant 0 : i32
    %c0_i32_1 = arith.constant 0 : i32
    return %c0_i32, %c0_i32_0 : i32, i32
  }
  func.func @transform_7(%arg0: i32) -> (i32, i32) {
    %c0_i32 = arith.constant 0 : i32
    %c0_i32_0 = arith.constant 0 : i32
    %c0_i32_1 = arith.constant 0 : i32
    return %c0_i32, %c0_i32_0 : i32, i32
  }
  func.func @transform_8(%arg0: i32) -> (i32, i32) {
    %c0_i32 = arith.constant 0 : i32
    %c0_i32_0 = arith.constant 0 : i32
    %c0_i32_1 = arith.constant 0 : i32
    return %c0_i32, %c0_i32_0 : i32, i32
  }
  func.func @transform_9(%arg0: i32) -> (i32, i32) {
    %c0_i32 = arith.constant 0 : i32
    %c0_i32_0 = arith.constant 0 : i32
    %c0_i32_1 = arith.constant 0 : i32
    return %c0_i32, %c0_i32_0 : i32, i32
  }
  func.func @transform_10(%arg0: i32) -> (i32, i32) {
    %c0_i32 = arith.constant 0 : i32
    %c0_i32_0 = arith.constant 0 : i32
    %c0_i32_1 = arith.constant 0 : i32
    return %c0_i32, %c0_i32_0 : i32, i32
  }
  func.func @transform_11(%arg0: i32) -> (i32, i32) {
    %c0_i32 = arith.constant 0 : i32
    %c0_i32_0 = arith.constant 0 : i32
    %c0_i32_1 = arith.constant 0 : i32
    return %c0_i32, %c0_i32_0 : i32, i32
  }
  func.func @transform_12(%arg0: i32) -> (i32, i32) {
    %c0_i32 = arith.constant 0 : i32
    %c0_i32_0 = arith.constant 0 : i32
    %c0_i32_1 = arith.constant 0 : i32
    return %c0_i32, %c0_i32_0 : i32, i32
  }
  func.func @transform_13(%arg0: i32) -> (i32, i32) {
    %c0_i32 = arith.constant 0 : i32
    %c0_i32_0 = arith.constant 0 : i32
    %c0_i32_1 = arith.constant 0 : i32
    return %c0_i32, %c0_i32_0 : i32, i32
  }
  func.func @transform_14(%arg0: i32) -> (i32, i32) {
    %c0_i32 = arith.constant 0 : i32
    %c0_i32_0 = arith.constant 0 : i32
    %c0_i32_1 = arith.constant 0 : i32
    return %c0_i32, %c0_i32_0 : i32, i32
  }
  func.func @transform_15(%arg0: i32) -> (i32, i32) {
    %c0_i32 = arith.constant 0 : i32
    %c0_i32_0 = arith.constant 0 : i32
    return %arg0, %c0_i32 : i32, i32
  }
}

</mosaic_0001>

<llo_original>
// kernel: tpu_custom_call.1
$region0: #{tpu_custom_call.1}
  #allocation0 [shape = 'u32[]', space=smem, size = 0x4, offset = 0x4, fixed_abs, tag = 'smem constant byte address 0x4 - core index']
  #allocation1 [shape = 'u32[72,128]{1,0:T(1,128)}', space=vmem, size = 0x9000, scoped, tag = 'internal scratch']
  %s0 = inlined_call_operand.vmem [shape: f32[16,16], index: 0, kind: input, shape index: {}]
  %s1 = inlined_call_operand.hbm [shape: f32[16,32], index: 1, kind: input, shape index: {}]
  %s2 = inlined_call_operand.vmem [shape: f32[1,32], index: 2, kind: input, shape index: {}]
  %s3 = inlined_call_operand.vmem [shape: f32[1,32], index: 3, kind: input, shape index: {}]
  %s4 = inlined_call_operand.vmem [shape: f32[1,32], index: 4, kind: input, shape index: {}]
  %s5 = inlined_call_operand.vmem [shape: f32[32,32], index: 5, kind: input, shape index: {}]
  %s6 = inlined_call_operand.vmem [shape: f32[1,32], index: 6, kind: input, shape index: {}]
  %s7 = inlined_call_operand.vmem [shape: f32[1,32], index: 7, kind: input, shape index: {}]
  %s8 = inlined_call_operand.vmem [shape: f32[1,32], index: 8, kind: input, shape index: {}]
  %s9 = inlined_call_operand.hbm [shape: f32[32,32], index: 9, kind: input, shape index: {}]
  %s10 = inlined_call_operand.vmem [shape: f32[1,32], index: 10, kind: input, shape index: {}]
  %s11 = inlined_call_operand.vmem [shape: f32[1,32], index: 11, kind: input, shape index: {}]
  %s12 = inlined_call_operand.vmem [shape: f32[1,32], index: 12, kind: input, shape index: {}]
  %s13 = inlined_call_operand.vmem [shape: f32[32,16], index: 13, kind: input, shape index: {}]
  %s14 = inlined_call_operand.vmem [shape: f32[1,16], index: 14, kind: input, shape index: {}]
  %s15 = inlined_call_operand.hbm [shape: f32[16,16], index: 15, kind: output, shape index: {}]
  %s16 = sld [smem:[#allocation0]]
  $region101: #{tpu_custom_call.1} parent=0
    _
  %s18 = ssub.s32 1, %s16
  %s19 = scalar_select 0, %s18, %s16
  $region1: #{tpu_custom_call.1} parent=0
    #allocation2 [shape = 'u8[8192]{0}', space=vmem, size = 0x2000, scoped, tag = 'input window, operand 1, single buffered']
    #allocation3 [shape = 's32[2]{0}', space=sflag, size = 0x8, scoped, tag = 'scoped memory for tpu_custom_call.1']
    #allocation4 [shape = 's32[2]{0}', space=sflag, size = 0x8, scoped, tag = 'scoped memory for tpu_custom_call.1']
    #allocation5 [shape = 'u8[16384]{0}', space=vmem, size = 0x4000, scoped, tag = 'input window, operand 9, single buffered']
    #allocation6 [shape = 's32[1]{0}', space=sflag, size = 0x4, scoped, tag = 'scoped memory for tpu_custom_call.1']
    #allocation7 [shape = 'u8[8192]{0}', space=vmem, size = 0x2000, scoped, tag = 'output window, operand 0']
    %20 = vsyncpa [#allocation3], 0
    %21 = vsyncpa [#allocation6], 0
    %22 = vsyncpa [#allocation4], 0
    %s23 = scalar_lea.sflag [#allocation4], 1
    %24 = vsyncpa %s23, 0
    loop: start=0, step=1, limit=4
    $region2: #{tpu_custom_call.1} parent=1 // loop_pre_header
      _
    $region3: #{tpu_custom_call.1} parent=1 // loop_header
      %s26 = sphi 0, %s30
      %p27 = scmp.ge.s32.totalorder %s26, 4
      %s36 = sphi 0, %s38
      %s39 = sphi 0, %s36
      %s40 = sphi 0, %s39
      %s56 = sphi 0, %s40
      %s60 = sphi 0, %s60
      %s62 = sphi 0, %s60
      %s63 = sphi 0, %s62
      %s77 = sphi 0, %s63
      %s81 = sphi 0, %s81
      %s83 = sphi 0, %s81
      %s84 = sphi 0, %s83
      %s98 = sphi 0, %s84
      %s102 = sphi 0, %s102
      %s104 = sphi 0, %s102
      %s105 = sphi 0, %s104
      %s119 = sphi 0, %s105
      %s123 = sphi 0, %s123
      %s125 = sphi 0, %s123
      %s126 = sphi 0, %s125
      %s140 = sphi 0, %s126
      %s144 = sphi 0, %s144
      %s146 = sphi 0, %s144
      %s147 = sphi 0, %s146
      %s161 = sphi 0, %s147
      %s165 = sphi 0, %s165
      %s167 = sphi 0, %s165
      %s168 = sphi 0, %s167
      %s182 = sphi 0, %s168
      %s186 = sphi 0, %s186
      %s188 = sphi 0, %s186
      %s189 = sphi 0, %s188
      %s203 = sphi 0, %s189
      %s207 = sphi 0, %s207
      %s209 = sphi 0, %s207
      %s210 = sphi 0, %s209
      %s224 = sphi 0, %s210
      %s228 = sphi 0, %s228
      %s230 = sphi 0, %s228
      %s231 = sphi 0, %s230
      %s245 = sphi 0, %s231
      %s249 = sphi 0, %s249
      %s251 = sphi 0, %s249
      %s252 = sphi 0, %s251
      %s266 = sphi 0, %s252
      %s270 = sphi 0, %s270
      %s272 = sphi 0, %s270
      %s273 = sphi 0, %s272
      %s287 = sphi 0, %s273
      %s291 = sphi 0, %s291
      %s293 = sphi 0, %s291
      %s294 = sphi 0, %s293
      %s308 = sphi 0, %s294
      %s312 = sphi 0, %s312
      %s314 = sphi 0, %s312
      %s315 = sphi 0, %s314
      %s329 = sphi 0, %s315
      %s333 = sphi 0, %s333
      %s335 = sphi 0, %s333
      %s336 = sphi 0, %s335
      %s350 = sphi 0, %s336
      %s356 = sphi 0, %s358
      %s359 = sphi 0, %s356
      %s360 = sphi 0, %s359
      %s376 = sphi 0, %s360
    $region4: #{tpu_custom_call.1} parent=1 // loop_header_branch
      %29 = sbr.rel (%p27) target = $region8
    $region5: #{tpu_custom_call.1} parent=1 // loop_body
      %s31 = ssub.s32 %s26, 1
      %s32 = ssub.s32 %s26, 2
      %s33 = sadd.s32 %s26, 1
      %s34 = ssub.s32 %s26, %s33
      %p35 = scmp.eq.s32.totalorder %s34, 0
      %s37 = sadd.s32 %s36, 1
      %s38 = scalar_select %p35, %s36, %s37
      %p41 = pneg %p35
      %p42 = scmp.eq.s32.totalorder %s26, 1
      %p43 = por %p41, %p42
      %p44 = scmp.ne.s32.totalorder %s36, %s39
      %p45 = scmp.eq.s32.totalorder %s26, 0
      %p46 = por %p44, %p45
      %p47 = scmp.ne.s32.totalorder %s36, %s39
      %p48 = scmp.eq.s32.totalorder %s31, 1
      %p49 = por %p47, %p48
      %p50 = scmp.ne.s32.totalorder %s39, %s40
      %p51 = scmp.eq.s32.totalorder %s31, 0
      %p52 = por %p50, %p51
      %p53 = scmp.ne.s32.totalorder %s39, %s40
      %p54 = scmp.eq.s32.totalorder %s32, 1
      %p55 = por %p53, %p54
      %p57 = scmp.ne.s32.totalorder %s40, %s56
      %p58 = scmp.eq.s32.totalorder %s32, 0
      %p59 = por %p57, %p58
      %s61 = sadd.s32 %s60, 1
      %p64 = scmp.eq.s32.totalorder %s26, 1
      %p65 = scmp.ne.s32.totalorder %s60, %s62
      %p66 = scmp.eq.s32.totalorder %s26, 0
      %p67 = por %p65, %p66
      %p68 = scmp.ne.s32.totalorder %s60, %s62
      %p69 = scmp.eq.s32.totalorder %s31, 1
      %p70 = por %p68, %p69
      %p71 = scmp.ne.s32.totalorder %s62, %s63
      %p72 = scmp.eq.s32.totalorder %s31, 0
      %p73 = por %p71, %p72
      %p74 = scmp.ne.s32.totalorder %s62, %s63
      %p75 = scmp.eq.s32.totalorder %s32, 1
      %p76 = por %p74, %p75
      %p78 = scmp.ne.s32.totalorder %s63, %s77
      %p79 = scmp.eq.s32.totalorder %s32, 0
      %p80 = por %p78, %p79
      %s82 = sadd.s32 %s81, 1
      %p85 = scmp.eq.s32.totalorder %s26, 1
      %p86 = scmp.ne.s32.totalorder %s81, %s83
      %p87 = scmp.eq.s32.totalorder %s26, 0
      %p88 = por %p86, %p87
      %p89 = scmp.ne.s32.totalorder %s81, %s83
      %p90 = scmp.eq.s32.totalorder %s31, 1
      %p91 = por %p89, %p90
      %p92 = scmp.ne.s32.totalorder %s83, %s84
      %p93 = scmp.eq.s32.totalorder %s31, 0
      %p94 = por %p92, %p93
      %p95 = scmp.ne.s32.totalorder %s83, %s84
      %p96 = scmp.eq.s32.totalorder %s32, 1
      %p97 = por %p95, %p96
      %p99 = scmp.ne.s32.totalorder %s84, %s98
      %p100 = scmp.eq.s32.totalorder %s32, 0
      %p101 = por %p99, %p100
      %s103 = sadd.s32 %s102, 1
      %p106 = scmp.eq.s32.totalorder %s26, 1
      %p107 = scmp.ne.s32.totalorder %s102, %s104
      %p108 = scmp.eq.s32.totalorder %s26, 0
      %p109 = por %p107, %p108
      %p110 = scmp.ne.s32.totalorder %s102, %s104
      %p111 = scmp.eq.s32.totalorder %s31, 1
      %p112 = por %p110, %p111
      %p113 = scmp.ne.s32.totalorder %s104, %s105
      %p114 = scmp.eq.s32.totalorder %s31, 0
      %p115 = por %p113, %p114
      %p116 = scmp.ne.s32.totalorder %s104, %s105
      %p117 = scmp.eq.s32.totalorder %s32, 1
      %p118 = por %p116, %p117
      %p120 = scmp.ne.s32.totalorder %s105, %s119
      %p121 = scmp.eq.s32.totalorder %s32, 0
      %p122 = por %p120, %p121
      %s124 = sadd.s32 %s123, 1
      %p127 = scmp.eq.s32.totalorder %s26, 1
      %p128 = scmp.ne.s32.totalorder %s123, %s125
      %p129 = scmp.eq.s32.totalorder %s26, 0
      %p130 = por %p128, %p129
      %p131 = scmp.ne.s32.totalorder %s123, %s125
      %p132 = scmp.eq.s32.totalorder %s31, 1
      %p133 = por %p131, %p132
      %p134 = scmp.ne.s32.totalorder %s125, %s126
      %p135 = scmp.eq.s32.totalorder %s31, 0
      %p136 = por %p134, %p135
      %p137 = scmp.ne.s32.totalorder %s125, %s126
      %p138 = scmp.eq.s32.totalorder %s32, 1
      %p139 = por %p137, %p138
      %p141 = scmp.ne.s32.totalorder %s126, %s140
      %p142 = scmp.eq.s32.totalorder %s32, 0
      %p143 = por %p141, %p142
      %s145 = sadd.s32 %s144, 1
      %p148 = scmp.eq.s32.totalorder %s26, 1
      %p149 = scmp.ne.s32.totalorder %s144, %s146
      %p150 = scmp.eq.s32.totalorder %s26, 0
      %p151 = por %p149, %p150
      %p152 = scmp.ne.s32.totalorder %s144, %s146
      %p153 = scmp.eq.s32.totalorder %s31, 1
      %p154 = por %p152, %p153
      %p155 = scmp.ne.s32.totalorder %s146, %s147
      %p156 = scmp.eq.s32.totalorder %s31, 0
      %p157 = por %p155, %p156
      %p158 = scmp.ne.s32.totalorder %s146, %s147
      %p159 = scmp.eq.s32.totalorder %s32, 1
      %p160 = por %p158, %p159
      %p162 = scmp.ne.s32.totalorder %s147, %s161
      %p163 = scmp.eq.s32.totalorder %s32, 0
      %p164 = por %p162, %p163
      %s166 = sadd.s32 %s165, 1
      %p169 = scmp.eq.s32.totalorder %s26, 1
      %p170 = scmp.ne.s32.totalorder %s165, %s167
      %p171 = scmp.eq.s32.totalorder %s26, 0
      %p172 = por %p170, %p171
      %p173 = scmp.ne.s32.totalorder %s165, %s167
      %p174 = scmp.eq.s32.totalorder %s31, 1
      %p175 = por %p173, %p174
      %p176 = scmp.ne.s32.totalorder %s167, %s168
      %p177 = scmp.eq.s32.totalorder %s31, 0
      %p178 = por %p176, %p177
      %p179 = scmp.ne.s32.totalorder %s167, %s168
      %p180 = scmp.eq.s32.totalorder %s32, 1
      %p181 = por %p179, %p180
      %p183 = scmp.ne.s32.totalorder %s168, %s182
      %p184 = scmp.eq.s32.totalorder %s32, 0
      %p185 = por %p183, %p184
      %s187 = sadd.s32 %s186, 1
      %p190 = scmp.eq.s32.totalorder %s26, 1
      %p191 = scmp.ne.s32.totalorder %s186, %s188
      %p192 = scmp.eq.s32.totalorder %s26, 0
      %p193 = por %p191, %p192
      %p194 = scmp.ne.s32.totalorder %s186, %s188
      %p195 = scmp.eq.s32.totalorder %s31, 1
      %p196 = por %p194, %p195
      %p197 = scmp.ne.s32.totalorder %s188, %s189
      %p198 = scmp.eq.s32.totalorder %s31, 0
      %p199 = por %p197, %p198
      %p200 = scmp.ne.s32.totalorder %s188, %s189
      %p201 = scmp.eq.s32.totalorder %s32, 1
      %p202 = por %p200, %p201
      %p204 = scmp.ne.s32.totalorder %s189, %s203
      %p205 = scmp.eq.s32.totalorder %s32, 0
      %p206 = por %p204, %p205
      %s208 = sadd.s32 %s207, 1
      %p211 = scmp.eq.s32.totalorder %s26, 1
      %p212 = scmp.ne.s32.totalorder %s207, %s209
      %p213 = scmp.eq.s32.totalorder %s26, 0
      %p214 = por %p212, %p213
      %p215 = scmp.ne.s32.totalorder %s207, %s209
      %p216 = scmp.eq.s32.totalorder %s31, 1
      %p217 = por %p215, %p216
      %p218 = scmp.ne.s32.totalorder %s209, %s210
      %p219 = scmp.eq.s32.totalorder %s31, 0
      %p220 = por %p218, %p219
      %p221 = scmp.ne.s32.totalorder %s209, %s210
      %p222 = scmp.eq.s32.totalorder %s32, 1
      %p223 = por %p221, %p222
      %p225 = scmp.ne.s32.totalorder %s210, %s224
      %p226 = scmp.eq.s32.totalorder %s32, 0
      %p227 = por %p225, %p226
      %s229 = sadd.s32 %s228, 1
      %p232 = scmp.eq.s32.totalorder %s26, 1
      %p233 = scmp.ne.s32.totalorder %s228, %s230
      %p234 = scmp.eq.s32.totalorder %s26, 0
      %p235 = por %p233, %p234
      %p236 = scmp.ne.s32.totalorder %s228, %s230
      %p237 = scmp.eq.s32.totalorder %s31, 1
      %p238 = por %p236, %p237
      %p239 = scmp.ne.s32.totalorder %s230, %s231
      %p240 = scmp.eq.s32.totalorder %s31, 0
      %p241 = por %p239, %p240
      %p242 = scmp.ne.s32.totalorder %s230, %s231
      %p243 = scmp.eq.s32.totalorder %s32, 1
      %p244 = por %p242, %p243
      %p246 = scmp.ne.s32.totalorder %s231, %s245
      %p247 = scmp.eq.s32.totalorder %s32, 0
      %p248 = por %p246, %p247
      %s250 = sadd.s32 %s249, 1
      %p253 = scmp.eq.s32.totalorder %s26, 1
      %p254 = scmp.ne.s32.totalorder %s249, %s251
      %p255 = scmp.eq.s32.totalorder %s26, 0
      %p256 = por %p254, %p255
      %p257 = scmp.ne.s32.totalorder %s249, %s251
      %p258 = scmp.eq.s32.totalorder %s31, 1
      %p259 = por %p257, %p258
      %p260 = scmp.ne.s32.totalorder %s251, %s252
      %p261 = scmp.eq.s32.totalorder %s31, 0
      %p262 = por %p260, %p261
      %p263 = scmp.ne.s32.totalorder %s251, %s252
      %p264 = scmp.eq.s32.totalorder %s32, 1
      %p265 = por %p263, %p264
      %p267 = scmp.ne.s32.totalorder %s252, %s266
      %p268 = scmp.eq.s32.totalorder %s32, 0
      %p269 = por %p267, %p268
      %s271 = sadd.s32 %s270, 1
      %p274 = scmp.eq.s32.totalorder %s26, 1
      %p275 = scmp.ne.s32.totalorder %s270, %s272
      %p276 = scmp.eq.s32.totalorder %s26, 0
      %p277 = por %p275, %p276
      %p278 = scmp.ne.s32.totalorder %s270, %s272
      %p279 = scmp.eq.s32.totalorder %s31, 1
      %p280 = por %p278, %p279
      %p281 = scmp.ne.s32.totalorder %s272, %s273
      %p282 = scmp.eq.s32.totalorder %s31, 0
      %p283 = por %p281, %p282
      %p284 = scmp.ne.s32.totalorder %s272, %s273
      %p285 = scmp.eq.s32.totalorder %s32, 1
      %p286 = por %p284, %p285
      %p288 = scmp.ne.s32.totalorder %s273, %s287
      %p289 = scmp.eq.s32.totalorder %s32, 0
      %p290 = por %p288, %p289
      %s292 = sadd.s32 %s291, 1
      %p295 = scmp.eq.s32.totalorder %s26, 1
      %p296 = scmp.ne.s32.totalorder %s291, %s293
      %p297 = scmp.eq.s32.totalorder %s26, 0
      %p298 = por %p296, %p297
      %p299 = scmp.ne.s32.totalorder %s291, %s293
      %p300 = scmp.eq.s32.totalorder %s31, 1
      %p301 = por %p299, %p300
      %p302 = scmp.ne.s32.totalorder %s293, %s294
      %p303 = scmp.eq.s32.totalorder %s31, 0
      %p304 = por %p302, %p303
      %p305 = scmp.ne.s32.totalorder %s293, %s294
      %p306 = scmp.eq.s32.totalorder %s32, 1
      %p307 = por %p305, %p306
      %p309 = scmp.ne.s32.totalorder %s294, %s308
      %p310 = scmp.eq.s32.totalorder %s32, 0
      %p311 = por %p309, %p310
      %s313 = sadd.s32 %s312, 1
      %p316 = scmp.eq.s32.totalorder %s26, 1
      %p317 = scmp.ne.s32.totalorder %s312, %s314
      %p318 = scmp.eq.s32.totalorder %s26, 0
      %p319 = por %p317, %p318
      %p320 = scmp.ne.s32.totalorder %s312, %s314
      %p321 = scmp.eq.s32.totalorder %s31, 1
      %p322 = por %p320, %p321
      %p323 = scmp.ne.s32.totalorder %s314, %s315
      %p324 = scmp.eq.s32.totalorder %s31, 0
      %p325 = por %p323, %p324
      %p326 = scmp.ne.s32.totalorder %s314, %s315
      %p327 = scmp.eq.s32.totalorder %s32, 1
      %p328 = por %p326, %p327
      %p330 = scmp.ne.s32.totalorder %s315, %s329
      %p331 = scmp.eq.s32.totalorder %s32, 0
      %p332 = por %p330, %p331
      %s334 = sadd.s32 %s333, 1
      %p337 = scmp.eq.s32.totalorder %s26, 1
      %p338 = scmp.ne.s32.totalorder %s333, %s335
      %p339 = scmp.eq.s32.totalorder %s26, 0
      %p340 = por %p338, %p339
      %p341 = scmp.ne.s32.totalorder %s333, %s335
      %p342 = scmp.eq.s32.totalorder %s31, 1
      %p343 = por %p341, %p342
      %p344 = scmp.ne.s32.totalorder %s335, %s336
      %p345 = scmp.eq.s32.totalorder %s31, 0
      %p346 = por %p344, %p345
      %p347 = scmp.ne.s32.totalorder %s335, %s336
      %p348 = scmp.eq.s32.totalorder %s32, 1
      %p349 = por %p347, %p348
      %p351 = scmp.ne.s32.totalorder %s336, %s350
      %p352 = scmp.eq.s32.totalorder %s32, 0
      %p353 = por %p351, %p352
      %s354 = ssub.s32 %s26, %s33
      %p355 = scmp.eq.s32.totalorder %s354, 0
      %s357 = sadd.s32 %s356, 1
      %s358 = scalar_select %p355, %s356, %s357
      %p361 = pneg %p355
      %p362 = scmp.eq.s32.totalorder %s26, 1
      %p363 = por %p361, %p362
      %p364 = scmp.ne.s32.totalorder %s356, %s359
      %p365 = scmp.eq.s32.totalorder %s26, 0
      %p366 = por %p364, %p365
      %p367 = scmp.ne.s32.totalorder %s356, %s359
      %p368 = scmp.eq.s32.totalorder %s31, 1
      %p369 = por %p367, %p368
      %p370 = scmp.ne.s32.totalorder %s359, %s360
      %p371 = scmp.eq.s32.totalorder %s31, 0
      %p372 = por %p370, %p371
      %p373 = scmp.ne.s32.totalorder %s359, %s360
      %p374 = scmp.eq.s32.totalorder %s32, 1
      %p375 = por %p373, %p374
      %p377 = scmp.ne.s32.totalorder %s360, %s376
      %p378 = scmp.eq.s32.totalorder %s32, 0
      %p379 = por %p377, %p378
      %p380 = scmp.le.s32.totalorder 1, %s26
      %p381 = scmp.lt.s32.totalorder %s26, 3
      %p382 = pnand %p380, %p381
      %p383 = pneg %p382
      // Predicated region
      $region9: #{tpu_custom_call.1} parent=5 // pred_check
        _
      $region10: #{tpu_custom_call.1} parent=5 // pred_check_branch
        %385 = sbr.rel (%p382) target = $region12
      $region11: #{tpu_custom_call.1} parent=5 // pred_region
        %s386 = ssub.s32 %s26, 1
        // Predicated region
        $region13: #{tpu_custom_call.1} parent=11 // pred_check
          %p387 = pneg %p73
        $region14: #{tpu_custom_call.1} parent=11 // pred_check_branch
          %389 = sbr.rel (%p387) target = $region16
        $region15: #{tpu_custom_call.1} parent=11 // pred_region
          %391 = vsyncadd [#allocation3], 0
          %s392 = sshll.u32 %s1, 4
          %s393 = int_to_ptr.hbm [resolvable:$true] %s392
          %s394 = sshll.u32 [#allocation2], 4
          %s395 = int_to_ptr.vmem [resolvable:$true] %s394
          %400 = dma.hbm_to_vmem [thread:$0]  %s393, 256, %s395, [#allocation3], 128, 128, 8
        $region16: #{tpu_custom_call.1} parent=11 // pred_fallthru
          _
        // Predicated region
        $region17: #{tpu_custom_call.1} parent=11 // pred_check
          %p401 = pneg %p94
        $region18: #{tpu_custom_call.1} parent=11 // pred_check_branch
          %403 = sbr.rel (%p401) target = $region20
        $region19: #{tpu_custom_call.1} parent=11 // pred_region
          _
        $region20: #{tpu_custom_call.1} parent=11 // pred_fallthru
          _
        // Predicated region
        $region21: #{tpu_custom_call.1} parent=11 // pred_check
          %p404 = pneg %p115
        $region22: #{tpu_custom_call.1} parent=11 // pred_check_branch
          %406 = sbr.rel (%p404) target = $region24
        $region23: #{tpu_custom_call.1} parent=11 // pred_region
          _
        $region24: #{tpu_custom_call.1} parent=11 // pred_fallthru
          _
        // Predicated region
        $region25: #{tpu_custom_call.1} parent=11 // pred_check
          %p407 = pneg %p136
        $region26: #{tpu_custom_call.1} parent=11 // pred_check_branch
          %409 = sbr.rel (%p407) target = $region28
        $region27: #{tpu_custom_call.1} parent=11 // pred_region
          _
        $region28: #{tpu_custom_call.1} parent=11 // pred_fallthru
          _
        // Predicated region
        $region29: #{tpu_custom_call.1} parent=11 // pred_check
          %p410 = pneg %p157
        $region30: #{tpu_custom_call.1} parent=11 // pred_check_branch
          %412 = sbr.rel (%p410) target = $region32
        $region31: #{tpu_custom_call.1} parent=11 // pred_region
          _
        $region32: #{tpu_custom_call.1} parent=11 // pred_fallthru
          _
        // Predicated region
        $region33: #{tpu_custom_call.1} parent=11 // pred_check
          %p413 = pneg %p178
        $region34: #{tpu_custom_call.1} parent=11 // pred_check_branch
          %415 = sbr.rel (%p413) target = $region36
        $region35: #{tpu_custom_call.1} parent=11 // pred_region
          _
        $region36: #{tpu_custom_call.1} parent=11 // pred_fallthru
          _
        // Predicated region
        $region37: #{tpu_custom_call.1} parent=11 // pred_check
          %p416 = pneg %p199
        $region38: #{tpu_custom_call.1} parent=11 // pred_check_branch
          %418 = sbr.rel (%p416) target = $region40
        $region39: #{tpu_custom_call.1} parent=11 // pred_region
          _
        $region40: #{tpu_custom_call.1} parent=11 // pred_fallthru
          _
        // Predicated region
        $region41: #{tpu_custom_call.1} parent=11 // pred_check
          %p419 = pneg %p220
        $region42: #{tpu_custom_call.1} parent=11 // pred_check_branch
          %421 = sbr.rel (%p419) target = $region44
        $region43: #{tpu_custom_call.1} parent=11 // pred_region
          _
        $region44: #{tpu_custom_call.1} parent=11 // pred_fallthru
          _
        // Predicated region
        $region45: #{tpu_custom_call.1} parent=11 // pred_check
          %p422 = pneg %p241
        $region46: #{tpu_custom_call.1} parent=11 // pred_check_branch
          %424 = sbr.rel (%p422) target = $region48
        $region47: #{tpu_custom_call.1} parent=11 // pred_region
          %426 = vsyncadd [#allocation6], 0
          %s427 = sshll.u32 %s9, 4
          %s428 = int_to_ptr.hbm [resolvable:$true] %s427
          %s429 = sshll.u32 [#allocation5], 4
          %s430 = int_to_ptr.vmem [resolvable:$true] %s429
          %435 = dma.hbm_to_vmem [thread:$0]  %s428, 512, %s430, [#allocation6], 128, 128, 8
        $region48: #{tpu_custom_call.1} parent=11 // pred_fallthru
          _
        // Predicated region
        $region49: #{tpu_custom_call.1} parent=11 // pred_check
          %p436 = pneg %p262
        $region50: #{tpu_custom_call.1} parent=11 // pred_check_branch
          %438 = sbr.rel (%p436) target = $region52
        $region51: #{tpu_custom_call.1} parent=11 // pred_region
          _
        $region52: #{tpu_custom_call.1} parent=11 // pred_fallthru
          _
        // Predicated region
        $region53: #{tpu_custom_call.1} parent=11 // pred_check
          %p439 = pneg %p283
        $region54: #{tpu_custom_call.1} parent=11 // pred_check_branch
          %441 = sbr.rel (%p439) target = $region56
        $region55: #{tpu_custom_call.1} parent=11 // pred_region
          _
        $region56: #{tpu_custom_call.1} parent=11 // pred_fallthru
          _
        // Predicated region
        $region57: #{tpu_custom_call.1} parent=11 // pred_check
          %p442 = pneg %p304
        $region58: #{tpu_custom_call.1} parent=11 // pred_check_branch
          %444 = sbr.rel (%p442) target = $region60
        $region59: #{tpu_custom_call.1} parent=11 // pred_region
          _
        $region60: #{tpu_custom_call.1} parent=11 // pred_fallthru
          _
        // Predicated region
        $region61: #{tpu_custom_call.1} parent=11 // pred_check
          %p445 = pneg %p325
        $region62: #{tpu_custom_call.1} parent=11 // pred_check_branch
          %447 = sbr.rel (%p445) target = $region64
        $region63: #{tpu_custom_call.1} parent=11 // pred_region
          _
        $region64: #{tpu_custom_call.1} parent=11 // pred_fallthru
          _
        // Predicated region
        $region65: #{tpu_custom_call.1} parent=11 // pred_check
          %p448 = pneg %p346
        $region66: #{tpu_custom_call.1} parent=11 // pred_check_branch
          %450 = sbr.rel (%p448) target = $region68
        $region67: #{tpu_custom_call.1} parent=11 // pred_region
          _
        $region68: #{tpu_custom_call.1} parent=11 // pred_fallthru
          _
      $region12: #{tpu_custom_call.1} parent=5 // pred_fallthru
        _
      %p451 = scmp.lt.s32.totalorder %s26, 2
      // Predicated region
      $region69: #{tpu_custom_call.1} parent=5 // pred_check
        %p452 = pneg %p451
      $region70: #{tpu_custom_call.1} parent=5 // pred_check_branch
        %454 = sbr.rel (%p452) target = $region72
      $region71: #{tpu_custom_call.1} parent=5 // pred_region
        // Predicated region
        $region73: #{tpu_custom_call.1} parent=71 // pred_check
          %p455 = pneg %p46
        $region74: #{tpu_custom_call.1} parent=71 // pred_check_branch
          %457 = sbr.rel (%p455) target = $region76
        $region75: #{tpu_custom_call.1} parent=71 // pred_region
          %p458 = scmp.lt.s32.totalorder %s26, 1
          %s459 = scalar_select %p458, %s26, 1
          %s460 = smul.addr %s459, 8
          %s461 = scalar_lea.vmem %s0, %s460
        $region76: #{tpu_custom_call.1} parent=71 // pred_fallthru
          _
      $region72: #{tpu_custom_call.1} parent=5 // pred_fallthru
        _
      %p462 = scmp.le.s32.totalorder 1, %s26
      %p463 = scmp.lt.s32.totalorder %s26, 3
      %p464 = pnand %p462, %p463
      %p465 = pneg %p464
      // Predicated region
      $region77: #{tpu_custom_call.1} parent=5 // pred_check
        _
      $region78: #{tpu_custom_call.1} parent=5 // pred_check_branch
        %467 = sbr.rel (%p464) target = $region80
      $region79: #{tpu_custom_call.1} parent=5 // pred_region
        %s468 = ssub.s32 %s26, 1
        // Predicated region
        $region81: #{tpu_custom_call.1} parent=79 // pred_check
          %p469 = pneg %p73
        $region82: #{tpu_custom_call.1} parent=79 // pred_check_branch
          %471 = sbr.rel (%p469) target = $region84
        $region83: #{tpu_custom_call.1} parent=79 // pred_region
          %473 = dma.done [#allocation3], 256
        $region84: #{tpu_custom_call.1} parent=79 // pred_fallthru
          _
        // Predicated region
        $region85: #{tpu_custom_call.1} parent=79 // pred_check
          %p474 = pneg %p241
        $region86: #{tpu_custom_call.1} parent=79 // pred_check_branch
          %476 = sbr.rel (%p474) target = $region88
        $region87: #{tpu_custom_call.1} parent=79 // pred_region
          %478 = dma.done [#allocation6], 512
        $region88: #{tpu_custom_call.1} parent=79 // pred_fallthru
          _
        %p479 = scmp.lt.s32.totalorder %s31, 1
        %s480 = scalar_select %p479, %s31, 1
        %s481 = smul.addr %s480, 8
        %s482 = scalar_lea.vmem %s0, %s481
        %p483 = pneg %p52
        %p484 = pneg %p49
        %p485 = pneg %p73
        %p486 = pneg %p70
        %p487 = pneg %p94
        %p488 = pneg %p91
        %p489 = pneg %p115
        %p490 = pneg %p112
        %p491 = pneg %p136
        %p492 = pneg %p133
        %p493 = pneg %p157
        %p494 = pneg %p154
        %p495 = pneg %p178
        %p496 = pneg %p175
        %p497 = pneg %p199
        %p498 = pneg %p196
        %p499 = pneg %p220
        %p500 = pneg %p217
        %p501 = pneg %p241
        %p502 = pneg %p238
        %p503 = pneg %p262
        %p504 = pneg %p259
        %p505 = pneg %p283
        %p506 = pneg %p280
        %p507 = pneg %p304
        %p508 = pneg %p301
        %p509 = pneg %p325
        %p510 = pneg %p322
        %p511 = pneg %p346
        %p512 = pneg %p343
        %p513 = pneg %p372
        %p514 = pneg %p369
        %s515 = sand.u32 %s359, 1
        %s516 = scalar_lea.sflag [#allocation4], %s515
        %s517 = sand.u32 %s359, 1
        %s518 = smul.addr %s517, 8
        %s519 = scalar_lea.vmem [#allocation7], %s518
        %p520 = scmp.lt.s32.totalorder %s31, 1
        %s521 = scalar_select %p520, %s31, 1
        %s522 = smul.addr %s521, 8
        %s523 = scalar_lea.vmem %s0, %s522
        %v524 = vld [vmem:[#allocation2] sm:$0xff]
        %v525 = vld [vmem:[#allocation2 + $0x8] sm:$0xff]
        %v526 = vld [vmem:[%s2] sm:$0x1]
        %v527 = vld [vmem:[%s3] sm:$0x1]
        %v528 = vld [vmem:[%s4] sm:$0x1]
        %v529 = vld [vmem:[%s5] sm:$0xff]
        %v530 = vld [vmem:[%s5 + $0x8] sm:$0xff]
        %v531 = vld [vmem:[%s5 + $0x10] sm:$0xff]
        %v532 = vld [vmem:[%s5 + $0x18] sm:$0xff]
        %v533 = vld [vmem:[%s6] sm:$0x1]
        %v534 = vld [vmem:[%s7] sm:$0x1]
        %v535 = vld [vmem:[%s8] sm:$0x1]
        %v536 = vld [vmem:[#allocation5] sm:$0xff]
        %v537 = vld [vmem:[#allocation5 + $0x8] sm:$0xff]
        %v538 = vld [vmem:[#allocation5 + $0x10] sm:$0xff]
        %v539 = vld [vmem:[#allocation5 + $0x18] sm:$0xff]
        %v540 = vld [vmem:[%s10] sm:$0x1]
        %v541 = vld [vmem:[%s11] sm:$0x1]
        %v542 = vld [vmem:[%s12] sm:$0x1]
        %v543 = vld [vmem:[%s13] sm:$0xff]
        %v544 = vld [vmem:[%s13 + $0x8] sm:$0xff]
        %v545 = vld [vmem:[%s13 + $0x10] sm:$0xff]
        %v546 = vld [vmem:[%s13 + $0x18] sm:$0xff]
        %v547 = vld [vmem:[%s14] sm:$0x1]
        %v548 = vld [vmem:[%s523] sm:$0xff]
        %v550 = vperm.slane %v526, 0
        %vm552 = vcmask 130048
        %v554 = vsel %vm552, %v548, 0
        %556 = vmatpush.msra.mxu0 0.0
        %557 = vmatpush.msra.mxu0 0.0
        %558 = vmatpush.msra.mxu0 0.0
        %559 = vmatpush.msra.mxu0 0.0
        %560 = vmatpush.msra.mxu0 0.0
        %561 = vmatpush.msra.mxu0 0.0
        %562 = vmatpush.msra.mxu0 0.0
        %563 = vmatpush.msra.mxu0 0.0
        %564 = vmatpush.msra.mxu0 0.0
        %565 = vmatpush.msra.mxu0 0.0
        %566 = vmatpush.msra.mxu0 0.0
        %567 = vmatpush.msra.mxu0 0.0
        %568 = vmatpush.msra.mxu0 0.0
        %569 = vmatpush.msra.mxu0 0.0
        %570 = vmatpush.msra.mxu0 %v525
        %571 = vmatpush.msra.mxu0 %v524
        %572 = vmatmul.f32.gmra.mxu0 %v554
        %v573 = vpop.f32.mrf.mxu0
        %v574 = vadd.f32 %v550, %v573
        %575 = vdwg.mxu0
        %vm576 = vcmask 261120
        %v577 = vsel %vm576, %v574, 0.0
        %578 = vadd.xlane.f32.xlu0 %v577
        %v579 = vpop.xlane.xlu0 %578
        %v580 = vrcp.pop 32.0
        %v581 = vmul.f32 32.0, %v580
        %v582 = vsub.f32 1.0, %v581
        %v583 = vmul.f32 %v580, %v582
        %v584 = vadd.f32 %v580, %v583
        %vm585 = vweird.f32 %v580
        %v586 = vsel %vm585, %v580, %v584
        %v587 = vmul.f32 %v579, %v586
        %v588 = vsub.f32 %v574, %v587
        %v589 = vmul.f32 %v588, %v588
        %v590 = vsel %vm576, %v589, 0.0
        %591 = vadd.xlane.f32.xlu0 %v590
        %v592 = vpop.xlane.xlu0 %591
        %v593 = vmul.f32 %v592, %v586
        %v594 = vadd.f32 %v593, 1e-05
        %v595 = vrsqrt.pop %v594
        %v596 = vmul.f32 %v595, %v594
        %v597 = vmul.f32 %v596, %v595
        %v598 = vmul.f32 0.5, %v597
        %v599 = vsub.f32 1.5, %v598
        %v600 = vmul.f32 %v595, %v599
        %vm601 = vweird.f32 %v594
        %vm602 = vweird.f32 %v595
        %vm603 = vmor %vm601, %vm602
        %v604 = vsel %vm603, %v595, %v600
        %v605 = vmul.f32 %v588, %v604
        %v607 = vperm.slane %v527, 0
        %v609 = vmul.f32 %v605, %v607
        %v611 = vperm.slane %v528, 0
        %v613 = vadd.f32 %v609, %v611
        %v614 = vmul.f32 %v613, 0.5
        %v615 = vmul.f32 %v613, 0.70710677
        %v616 = vmul.f32 %v615, %v615
        %v617 = vmin.f32 16.0, %v616
        %v618 = vmul.f32 %v617, 2.1237322e-06
        %v619 = vadd.f32 %v618, 0.00028619796
        %v620 = vmul.f32 %v617, %v619
        %v621 = vadd.f32 %v620, 0.0036580483
        %v622 = vmul.f32 %v617, %v621
        %v623 = vadd.f32 %v622, 0.05243302
        %v624 = vmul.f32 %v617, %v623
        %v625 = vadd.f32 %v624, 0.18741608
        %v626 = vmul.f32 %v617, %v625
        %v627 = vadd.f32 %v626, 1.1283791
        %v628 = vmul.f32 %v615, %v627
        %v629 = vmul.f32 %v617, 3.8918573e-05
        %v630 = vadd.f32 %v629, 0.001143296
        %v631 = vmul.f32 %v617, %v630
        %v632 = vadd.f32 %v631, 0.014752088
        %v633 = vmul.f32 %v617, %v632
        %v634 = vadd.f32 %v633, 0.112945676
        %v635 = vmul.f32 %v617, %v634
        %v636 = vadd.f32 %v635, 0.4994258
        %v637 = vmul.f32 %v617, %v636
        %v638 = vadd.f32 %v637, 1.0
        %v639 = vrcp.pop %v638
        %v640 = vmul.f32 %v638, %v639
        %v641 = vsub.f32 1.0, %v640
        %v642 = vmul.f32 %v639, %v641
        %v643 = vadd.f32 %v639, %v642
        %vm644 = vweird.f32 %v638
        %vm645 = vweird.f32 %v639
        %vm646 = vmor %vm644, %vm645
        %v647 = vsel %vm646, %v639, %v643
        %v648 = vand.u32 2147483647, %v638
        %vm649 = vcmp.eq.f32.partialorder %v648, 8.507059e+37
        %v650 = vand.u32 %v638, 2147483648
        %v651 = vor.u32 1.1754944e-38, %v650
        %v652 = vsel %vm649, %v651, %v647
        %v653 = vmul.f32 %v628, %v652
        %v654 = vmin.f32 %v653, 1.0
        %v655 = vmax.f32 %v654, -1.0
        %v656 = vadd.f32 %v655, 1.0
        %v657 = vmul.f32 %v614, %v656
        %v659 = vperm.slane %v533, 0
        %v662 = vsel %vm576, %v657, 0
        %664 = vmatpush.msra.mxu0 0.0
        %665 = vmatpush.msra.mxu0 0.0
        %666 = vmatpush.msra.mxu0 0.0
        %667 = vmatpush.msra.mxu0 0.0
        %668 = vmatpush.msra.mxu0 0.0
        %669 = vmatpush.msra.mxu0 0.0
        %670 = vmatpush.msra.mxu0 0.0
        %671 = vmatpush.msra.mxu0 0.0
        %672 = vmatpush.msra.mxu0 0.0
        %673 = vmatpush.msra.mxu0 0.0
        %674 = vmatpush.msra.mxu0 0.0
        %675 = vmatpush.msra.mxu0 0.0
        %676 = vmatpush.msra.mxu0 %v532
        %677 = vmatpush.msra.mxu0 %v531
        %678 = vmatpush.msra.mxu0 %v530
        %679 = vmatpush.msra.mxu0 %v529
        %680 = vmatmul.f32.gmra.mxu0 %v662
        %v681 = vpop.f32.mrf.mxu0
        %v682 = vadd.f32 %v659, %v681
        %683 = vdwg.mxu0
        %v684 = vsel %vm576, %v682, 0.0
        %685 = vadd.xlane.f32.xlu0 %v684
        %v686 = vpop.xlane.xlu0 %685
        %v687 = vmul.f32 %v686, %v586
        %v688 = vsub.f32 %v682, %v687
        %v689 = vmul.f32 %v688, %v688
        %v690 = vsel %vm576, %v689, 0.0
        %691 = vadd.xlane.f32.xlu0 %v690
        %v692 = vpop.xlane.xlu0 %691
        %v693 = vmul.f32 %v692, %v586
        %v694 = vadd.f32 %v693, 1e-05
        %v695 = vrsqrt.pop %v694
        %v696 = vmul.f32 %v695, %v694
        %v697 = vmul.f32 %v696, %v695
        %v698 = vmul.f32 0.5, %v697
        %v699 = vsub.f32 1.5, %v698
        %v700 = vmul.f32 %v695, %v699
        %vm701 = vweird.f32 %v694
        %vm702 = vweird.f32 %v695
        %vm703 = vmor %vm701, %vm702
        %v704 = vsel %vm703, %v695, %v700
        %v705 = vmul.f32 %v688, %v704
        %v707 = vperm.slane %v534, 0
        %v709 = vmul.f32 %v705, %v707
        %v711 = vperm.slane %v535, 0
        %v713 = vadd.f32 %v709, %v711
        %v714 = vmul.f32 %v713, 0.5
        %v715 = vmul.f32 %v713, 0.70710677
        %v716 = vmul.f32 %v715, %v715
        %v717 = vmin.f32 16.0, %v716
        %v718 = vmul.f32 %v717, 2.1237322e-06
        %v719 = vadd.f32 %v718, 0.00028619796
        %v720 = vmul.f32 %v717, %v719
        %v721 = vadd.f32 %v720, 0.0036580483
        %v722 = vmul.f32 %v717, %v721
        %v723 = vadd.f32 %v722, 0.05243302
        %v724 = vmul.f32 %v717, %v723
        %v725 = vadd.f32 %v724, 0.18741608
        %v726 = vmul.f32 %v717, %v725
        %v727 = vadd.f32 %v726, 1.1283791
        %v728 = vmul.f32 %v715, %v727
        %v729 = vmul.f32 %v717, 3.8918573e-05
        %v730 = vadd.f32 %v729, 0.001143296
        %v731 = vmul.f32 %v717, %v730
        %v732 = vadd.f32 %v731, 0.014752088
        %v733 = vmul.f32 %v717, %v732
        %v734 = vadd.f32 %v733, 0.112945676
        %v735 = vmul.f32 %v717, %v734
        %v736 = vadd.f32 %v735, 0.4994258
        %v737 = vmul.f32 %v717, %v736
        %v738 = vadd.f32 %v737, 1.0
        %v739 = vrcp.pop %v738
        %v740 = vmul.f32 %v738, %v739
        %v741 = vsub.f32 1.0, %v740
        %v742 = vmul.f32 %v739, %v741
        %v743 = vadd.f32 %v739, %v742
        %vm744 = vweird.f32 %v738
        %vm745 = vweird.f32 %v739
        %vm746 = vmor %vm744, %vm745
        %v747 = vsel %vm746, %v739, %v743
        %v748 = vand.u32 2147483647, %v738
        %vm749 = vcmp.eq.f32.partialorder %v748, 8.507059e+37
        %v750 = vand.u32 %v738, 2147483648
        %v751 = vor.u32 1.1754944e-38, %v750
        %v752 = vsel %vm749, %v751, %v747
        %v753 = vmul.f32 %v728, %v752
        %v754 = vmin.f32 %v753, 1.0
        %v755 = vmax.f32 %v754, -1.0
        %v756 = vadd.f32 %v755, 1.0
        %v757 = vmul.f32 %v714, %v756
        %v759 = vperm.slane %v540, 0
        %v762 = vsel %vm576, %v757, 0
        %764 = vmatpush.msra.mxu0 0.0
        %765 = vmatpush.msra.mxu0 0.0
        %766 = vmatpush.msra.mxu0 0.0
        %767 = vmatpush.msra.mxu0 0.0
        %768 = vmatpush.msra.mxu0 0.0
        %769 = vmatpush.msra.mxu0 0.0
        %770 = vmatpush.msra.mxu0 0.0
        %771 = vmatpush.msra.mxu0 0.0
        %772 = vmatpush.msra.mxu0 0.0
        %773 = vmatpush.msra.mxu0 0.0
        %774 = vmatpush.msra.mxu0 0.0
        %775 = vmatpush.msra.mxu0 0.0
        %776 = vmatpush.msra.mxu0 %v539
        %777 = vmatpush.msra.mxu0 %v538
        %778 = vmatpush.msra.mxu0 %v537
        %779 = vmatpush.msra.mxu0 %v536
        %780 = vmatmul.f32.gmra.mxu0 %v762
        %v781 = vpop.f32.mrf.mxu0
        %v782 = vadd.f32 %v759, %v781
        %783 = vdwg.mxu0
        %v784 = vsel %vm576, %v782, 0.0
        %785 = vadd.xlane.f32.xlu0 %v784
        %v786 = vpop.xlane.xlu0 %785
        %v787 = vmul.f32 %v786, %v586
        %v788 = vsub.f32 %v782, %v787
        %v789 = vmul.f32 %v788, %v788
        %v790 = vsel %vm576, %v789, 0.0
        %791 = vadd.xlane.f32.xlu0 %v790
        %v792 = vpop.xlane.xlu0 %791
        %v793 = vmul.f32 %v792, %v586
        %v794 = vadd.f32 %v793, 1e-05
        %v795 = vrsqrt.pop %v794
        %v796 = vmul.f32 %v795, %v794
        %v797 = vmul.f32 %v796, %v795
        %v798 = vmul.f32 0.5, %v797
        %v799 = vsub.f32 1.5, %v798
        %v800 = vmul.f32 %v795, %v799
        %vm801 = vweird.f32 %v794
        %vm802 = vweird.f32 %v795
        %vm803 = vmor %vm801, %vm802
        %v804 = vsel %vm803, %v795, %v800
        %v805 = vmul.f32 %v788, %v804
        %v807 = vperm.slane %v541, 0
        %v809 = vmul.f32 %v805, %v807
        %v811 = vperm.slane %v542, 0
        %v813 = vadd.f32 %v809, %v811
        %v814 = vmul.f32 %v813, 0.5
        %v815 = vmul.f32 %v813, 0.70710677
        %v816 = vmul.f32 %v815, %v815
        %v817 = vmin.f32 16.0, %v816
        %v818 = vmul.f32 %v817, 2.1237322e-06
        %v819 = vadd.f32 %v818, 0.00028619796
        %v820 = vmul.f32 %v817, %v819
        %v821 = vadd.f32 %v820, 0.0036580483
        %v822 = vmul.f32 %v817, %v821
        %v823 = vadd.f32 %v822, 0.05243302
        %v824 = vmul.f32 %v817, %v823
        %v825 = vadd.f32 %v824, 0.18741608
        %v826 = vmul.f32 %v817, %v825
        %v827 = vadd.f32 %v826, 1.1283791
        %v828 = vmul.f32 %v815, %v827
        %v829 = vmul.f32 %v817, 3.8918573e-05
        %v830 = vadd.f32 %v829, 0.001143296
        %v831 = vmul.f32 %v817, %v830
        %v832 = vadd.f32 %v831, 0.014752088
        %v833 = vmul.f32 %v817, %v832
        %v834 = vadd.f32 %v833, 0.112945676
        %v835 = vmul.f32 %v817, %v834
        %v836 = vadd.f32 %v835, 0.4994258
        %v837 = vmul.f32 %v817, %v836
        %v838 = vadd.f32 %v837, 1.0
        %v839 = vrcp.pop %v838
        %v840 = vmul.f32 %v838, %v839
        %v841 = vsub.f32 1.0, %v840
        %v842 = vmul.f32 %v839, %v841
        %v843 = vadd.f32 %v839, %v842
        %vm844 = vweird.f32 %v838
        %vm845 = vweird.f32 %v839
        %vm846 = vmor %vm844, %vm845
        %v847 = vsel %vm846, %v839, %v843
        %v848 = vand.u32 2147483647, %v838
        %vm849 = vcmp.eq.f32.partialorder %v848, 8.507059e+37
        %v850 = vand.u32 %v838, 2147483648
        %v851 = vor.u32 1.1754944e-38, %v850
        %v852 = vsel %vm849, %v851, %v847
        %v853 = vmul.f32 %v828, %v852
        %v854 = vmin.f32 %v853, 1.0
        %v855 = vmax.f32 %v854, -1.0
        %v856 = vadd.f32 %v855, 1.0
        %v857 = vmul.f32 %v814, %v856
        %v859 = vperm.slane %v547, 0
        %v862 = vsel %vm576, %v857, 0
        %864 = vmatpush.msra.mxu0 0.0
        %865 = vmatpush.msra.mxu0 0.0
        %866 = vmatpush.msra.mxu0 0.0
        %867 = vmatpush.msra.mxu0 0.0
        %868 = vmatpush.msra.mxu0 0.0
        %869 = vmatpush.msra.mxu0 0.0
        %870 = vmatpush.msra.mxu0 0.0
        %871 = vmatpush.msra.mxu0 0.0
        %872 = vmatpush.msra.mxu0 0.0
        %873 = vmatpush.msra.mxu0 0.0
        %874 = vmatpush.msra.mxu0 0.0
        %875 = vmatpush.msra.mxu0 0.0
        %876 = vmatpush.msra.mxu0 %v546
        %877 = vmatpush.msra.mxu0 %v545
        %878 = vmatpush.msra.mxu0 %v544
        %879 = vmatpush.msra.mxu0 %v543
        %880 = vmatmul.f32.gmra.mxu0 %v862
        %v881 = vpop.f32.mrf.mxu0
        %v882 = vadd.f32 %v859, %v881
        %883 = vdwg.mxu0
        %v884 = vlaneseq
        %v885 = vand.u32 %v884, 127
        %vm886 = vcmp.lt.s32.totalorder %v885, 8
        %v887 = vtanh.pop %v882
        %v888 = vmax.f32 %v882, 0.0
        %v889 = vand.u32 2147483647, %v882
        %v890 = vsub.f32 0.0, %v889
        %v891 = vmul.f32 %v890, 1.442695
        %v892 = vpow.pop %v891
        %v893 = vadd.f32 %v892, 1.0
        %v894 = vlog2.pop %v893
        %v895 = vmul.f32 %v894, 0.6931472
        %v896 = vadd.f32 %v888, %v895
        %v897 = vsel %vm886, %v887, %v896
        %898 = vst.msk [vmem:[%s519] sm:$0xff] %vm552, %v897
        %s899 = sand.u32 %s359, 1
        %s900 = scalar_lea.sflag [#allocation4], %s899
        %s901 = sand.u32 %s359, 1
        %s902 = smul.addr %s901, 8
        %s903 = scalar_lea.vmem [#allocation7], %s902
        // Predicated region
        $region89: #{tpu_custom_call.1} parent=79 // pred_check
          %p904 = pneg %p369
        $region90: #{tpu_custom_call.1} parent=79 // pred_check_branch
          %906 = sbr.rel (%p904) target = $region92
        $region91: #{tpu_custom_call.1} parent=79 // pred_region
          %908 = vsyncadd %s900, 0
          %s909 = smul.addr %s31, 8
          %s910 = scalar_lea.hbm %s15, %s909
          %s912 = sshll.u32 %s903, 4
          %s913 = int_to_ptr.vmem [resolvable:$true] %s912
          %s914 = sshll.u32 %s910, 4
          %s915 = int_to_ptr.hbm [resolvable:$true] %s914
          %917 = dma.vmem_to_hbm [thread:$0]  %s913, 128, %s915, %s900
        $region92: #{tpu_custom_call.1} parent=79 // pred_fallthru
          _
      $region80: #{tpu_custom_call.1} parent=5 // pred_fallthru
        _
      %p918 = scmp.le.s32.totalorder 2, %s26
      // Predicated region
      $region93: #{tpu_custom_call.1} parent=5 // pred_check
        %p919 = pneg %p918
      $region94: #{tpu_custom_call.1} parent=5 // pred_check_branch
        %921 = sbr.rel (%p919) target = $region96
      $region95: #{tpu_custom_call.1} parent=5 // pred_region
        %s922 = ssub.s32 %s26, 2
        // Predicated region
        $region97: #{tpu_custom_call.1} parent=95 // pred_check
          %p923 = pneg %p375
        $region98: #{tpu_custom_call.1} parent=95 // pred_check_branch
          %925 = sbr.rel (%p923) target = $region100
        $region99: #{tpu_custom_call.1} parent=95 // pred_region
          %s926 = sand.u32 %s360, 1
          %s927 = scalar_lea.sflag [#allocation4], %s926
          %s928 = sand.u32 %s360, 1
          %s929 = smul.addr %s928, 8
          %s930 = scalar_lea.vmem [#allocation7], %s929
          %932 = dma.done %s927, 128
        $region100: #{tpu_custom_call.1} parent=95 // pred_fallthru
          _
      $region96: #{tpu_custom_call.1} parent=5 // pred_fallthru
        _
    $region6: #{tpu_custom_call.1} parent=1 // loop_footer
      %s30 = sadd.s32 1, %s26
    $region7: #{tpu_custom_call.1} parent=1 // loop_footer_branch
      %25 = sbr.rel target = $region3
    $region8: #{tpu_custom_call.1} parent=1 // loop_exit
      _
    %933 = vsyncpa [#allocation3], 1
    %s934 = scalar_lea.sflag [#allocation3], 1
    %935 = vsyncpa %s934, 1
    %936 = vsyncpa [#allocation6], 1
    %937 = vsyncpa [#allocation4], 1
    %s938 = scalar_lea.sflag [#allocation4], 1
    %939 = vsyncpa %s938, 1

</llo_original>
